<compile_context>
chip_gen: v7x
topology: tpu7x:2x2x1
jax: 0.10.0
libtpu: 0.0.40
codegen_flags: <defaults>
</compile_context>

<pallas_src>
import jax
import jax.numpy as jnp
from jax.experimental import pallas as pl
from jax.experimental.pallas import tpu as pltpu


def _round_up(x, m):
    return ((x + m - 1) // m) * m


def _feature_process_kernel(obs_ref, w1_ref, b1_ref, w2_ref, b2_ref,
                            w3_ref, b3_ref, out_ref):
    # Weights may be f32 or bf16; MXU accumulation is f32; bias-add/ReLU f32.
    w_dtype = w1_ref.dtype
    obs = obs_ref[...]

    # layer1 + relu
    x = jnp.dot(obs.astype(w_dtype), w1_ref[...],
                preferred_element_type=jnp.float32)
    x = jnp.maximum(x + b1_ref[...], 0.0)

    # layer2 + relu
    x = jnp.dot(x.astype(w_dtype), w2_ref[...],
                preferred_element_type=jnp.float32)
    x = jnp.maximum(x + b2_ref[...], 0.0)

    # layer3 + relu (output written directly at its true width)
    y = jnp.dot(x.astype(w_dtype), w3_ref[...],
                preferred_element_type=jnp.float32)
    y = jnp.maximum(y + b3_ref[...], 0.0)

    out_ref[...] = y.astype(out_ref.dtype)


def feature_process_forward(obs, w1, b1, w2, b2, w3, b3, *,
                            tile_b=512, param_dtype=None, out_dtype=None):
    """Pallas wrapper: obs [B, obs_dim] -> features [B, hidden].

    tile_b:      batch rows per grid step (multiple of 8; default 512).
    param_dtype: optional weight dtype (bf16 is MXU-native on v5e/v6e/v7x).
    out_dtype:   output dtype; defaults to obs.dtype (bf16 in -> bf16 out).
    """
    obs = jnp.asarray(obs)              # keep caller's activation dtype
    B, obs_dim = obs.shape

    w1 = jnp.asarray(w1)
    w2 = jnp.asarray(w2)
    w3 = jnp.asarray(w3)
    # Biases stay f32 so bias-add/ReLU run in f32 on the VPU (v5e-safe).
    b1 = jnp.asarray(b1, jnp.float32).reshape(1, -1)
    b2 = jnp.asarray(b2, jnp.float32).reshape(1, -1)
    b3 = jnp.asarray(b3, jnp.float32).reshape(1, -1)

    if param_dtype is not None:
        w1 = w1.astype(param_dtype)
        w2 = w2.astype(param_dtype)
        w3 = w3.astype(param_dtype)

    h2 = w1.shape[1]
    hidden = w3.shape[1]
    if out_dtype is None:
        out_dtype = obs.dtype
    out_dtype = jnp.dtype(out_dtype)

    # --- batch tiling ------------------------------------------------------
    # The kernel is HBM / per-step-overhead bound, so pick the biggest tile
    # that still leaves v7x's two TensorCores several grid steps each.
    tile_b = max(8, _round_up(int(tile_b), 8))
    tile_b = min(tile_b, _round_up(B, 8))
    if B >= 8 * 128:
        cap = max(128, ((B // 8) // 8) * 8)   # >= ~8 grid steps, >= 128 rows
        tile_b = min(tile_b, cap)
    nb = pl.cdiv(B, tile_b)                   # ragged tail handled by Pallas

    # Resident weights/biases: constant block index -> DMA'd once, stay in
    # VMEM across all grid steps (no per-step re-DMA for unchanged blocks).
    resident = lambda arr: pl.BlockSpec(arr.shape, lambda i: (0, 0))

    # Advisory cost estimate (helps XLA schedule around this tiny kernel).
    flops = 2 * B * (obs_dim * h2 + h2 * h2 + h2 * hidden)
    bytes_accessed = (
        obs.size * obs.dtype.itemsize
        + B * hidden * out_dtype.itemsize
        + sum(int(a.size) * a.dtype.itemsize for a in (w1, b1, w2, b2, w3, b3))
    )
    cost = pl.CostEstimate(flops=flops, transcendentals=0,
                           bytes_accessed=bytes_accessed)

    out = pl.pallas_call(
        _feature_process_kernel,
        out_shape=jax.ShapeDtypeStruct((B, hidden), out_dtype),
        grid_spec=pltpu.PrefetchScalarGridSpec(
            num_scalar_prefetch=0,
            grid=(nb,),
            in_specs=[
                pl.BlockSpec((tile_b, obs_dim), lambda i: (i, 0)),
                resident(w1), resident(b1),
                resident(w2), resident(b2),
                resident(w3), resident(b3),
            ],
            out_specs=pl.BlockSpec((tile_b, hidden), lambda i: (i, 0)),
        ),
        compiler_params=pltpu.CompilerParams(
            # Shards the batch grid across v7x's 2 TCs; no-op on v5e/v6e.
            dimension_semantics=("parallel",)),
        cost_estimate=cost,
    )(obs, w1, b1, w2, b2, w3, b3)

    return out


def _init_linear(key, fan_in, fan_out):
    """Deterministic init mimicking nn.Linear (uniform +/- 1/sqrt(fan_in))."""
    kw, kb = jax.random.split(key)
    bound = 1.0 / jnp.sqrt(float(fan_in))
    w = jax.random.uniform(kw, (fan_in, fan_out), jnp.float32, -bound, bound)
    b = jax.random.uniform(kb, (1, fan_out), jnp.float32, -bound, bound)
    return w, b


if __name__ == "__main__":
    # Shapes consistent with the module (args.obs_dim=32, hidden_size=32).
    # batch=200 with tile_b=128 exercises the multi-step grid AND the ragged
    # trailing block (no wrapper padding / slicing anymore).
    batch = 200
    obs_dim = 32
    hidden_size = 32

    key = jax.random.PRNGKey(0)
    k_obs, k1, k2, k3 = jax.random.split(key, 4)

    obs = jax.random.normal(k_obs, (batch, obs_dim), jnp.float32)
    w1, b1 = _init_linear(k1, obs_dim, hidden_size * 2)
    w2, b2 = _init_linear(k2, hidden_size * 2, hidden_size * 2)
    w3, b3 = _init_linear(k3, hidden_size * 2, hidden_size)

    relu = lambda z: jnp.maximum(z, 0.0)

    # --- f32 I/O, f32 weights (matches the PyTorch reference) ---
    out = feature_process_forward(obs, w1, b1, w2, b2, w3, b3, tile_b=128)
    out = jax.block_until_ready(out)
    ref = relu(relu(relu(obs @ w1 + b1) @ w2 + b2) @ w3 + b3)
    assert out.shape == (batch, hidden_size)
    assert out.dtype == jnp.float32
    assert jnp.allclose(out, ref, atol=1e-4, rtol=1e-4)

    # --- default tile_b path (single ragged block) ---
    out_def = feature_process_forward(obs, w1, b1, w2, b2, w3, b3)
    out_def = jax.block_until_ready(out_def)
    assert jnp.allclose(out_def, ref, atol=1e-4, rtol=1e-4)

    # --- bf16 I/O + bf16 weights (MXU-native on v5e/v6e/v7x; f32 accum) ---
    obs_bf = obs.astype(jnp.bfloat16)
    out_bf = feature_process_forward(obs_bf, w1, b1, w2, b2, w3, b3,
                                     tile_b=128, param_dtype=jnp.bfloat16)
    out_bf = jax.block_until_ready(out_bf)
    assert out_bf.shape == (batch, hidden_size)
    assert out_bf.dtype == jnp.bfloat16
    c = lambda z: z.astype(jnp.bfloat16)
    r = relu(jnp.dot(c(obs), c(w1), preferred_element_type=jnp.float32) + b1)
    r = relu(jnp.dot(c(r), c(w2), preferred_element_type=jnp.float32) + b2)
    r = relu(jnp.dot(c(r), c(w3), preferred_element_type=jnp.float32) + b3)
    assert jnp.allclose(out_bf.astype(jnp.float32), r, atol=3e-2, rtol=3e-2)

    # TODO(synk): layer_action / layer_o_a / encoder_interaction are unused in
    # the module's forward(), so they are intentionally not implemented here.

    print("KERNEL_OK")
</pallas_src>

<mosaic_0001>
module attributes {stable_mosaic.version = 11 : i64} {
  func.func @_feature_process_kernel(%arg0: i32, %arg1: memref<128x32xf32, #tpu.memory_space<vmem>>, %arg2: memref<32x64xf32, #tpu.memory_space<vmem>>, %arg3: memref<1x64xf32, #tpu.memory_space<vmem>>, %arg4: memref<64x64xf32, #tpu.memory_space<vmem>>, %arg5: memref<1x64xf32, #tpu.memory_space<vmem>>, %arg6: memref<64x32xf32, #tpu.memory_space<vmem>>, %arg7: memref<1x32xf32, #tpu.memory_space<vmem>>, %arg8: memref<128x32xf32, #tpu.memory_space<vmem>>) attributes {dimension_semantics = [#tpu.dimension_semantics<parallel>], iteration_bounds = array<i64: 2>, scalar_prefetch = 0 : i64, scratch_operands = 0 : i64, tpu.core_type = #tpu.core_type<tc>, window_params = [{transform_indices = @transform_0, window_bounds = array<i64: 128, 32>}, {pipeline_mode = #tpu.pipeline_mode<synchronous>, transform_indices = @transform_1, window_bounds = array<i64: 32, 64>}, {pipeline_mode = #tpu.pipeline_mode<synchronous>, transform_indices = @transform_2, window_bounds = array<i64: 1, 64>}, {pipeline_mode = #tpu.pipeline_mode<synchronous>, transform_indices = @transform_3, window_bounds = array<i64: 64, 64>}, {pipeline_mode = #tpu.pipeline_mode<synchronous>, transform_indices = @transform_4, window_bounds = array<i64: 1, 64>}, {pipeline_mode = #tpu.pipeline_mode<synchronous>, transform_indices = @transform_5, window_bounds = array<i64: 64, 32>}, {pipeline_mode = #tpu.pipeline_mode<synchronous>, transform_indices = @transform_6, window_bounds = array<i64: 1, 32>}, {transform_indices = @transform_7, window_bounds = array<i64: 128, 32>}]} {
    %c0 = arith.constant 0 : index
    %c0_0 = arith.constant 0 : index
    %0 = vector.load %arg1[%c0, %c0_0] : memref<128x32xf32, #tpu.memory_space<vmem>>, vector<128x32xf32>
    %c0_1 = arith.constant 0 : index
    %c0_2 = arith.constant 0 : index
    %1 = vector.load %arg2[%c0_1, %c0_2] : memref<32x64xf32, #tpu.memory_space<vmem>>, vector<32x64xf32>
    %cst = arith.constant dense<0.000000e+00> : vector<128x64xf32>
    %2 = tpu.matmul %0, %1, %cst {dimension_numbers = #tpu.dot_dimension_numbers<[1], [0], [0], [1], [0, 0, 1, 1], [], []>} : vector<128x32xf32>, vector<32x64xf32>, vector<128x64xf32> -> vector<128x64xf32>
    %c0_3 = arith.constant 0 : index
    %c0_4 = arith.constant 0 : index
    %3 = vector.load %arg3[%c0_3, %c0_4] : memref<1x64xf32, #tpu.memory_space<vmem>>, vector<1x64xf32>
    %4 = vector.broadcast %3 : vector<1x64xf32> to vector<128x64xf32>
    %5 = arith.addf %2, %4 : vector<128x64xf32>
    %cst_5 = arith.constant 0.000000e+00 : f32
    %6 = vector.broadcast %cst_5 : f32 to vector<128x64xf32>
    %7 = arith.maximumf %5, %6 : vector<128x64xf32>
    %c0_6 = arith.constant 0 : index
    %c0_7 = arith.constant 0 : index
    %8 = vector.load %arg4[%c0_6, %c0_7] : memref<64x64xf32, #tpu.memory_space<vmem>>, vector<64x64xf32>
    %cst_8 = arith.constant dense<0.000000e+00> : vector<128x64xf32>
    %9 = tpu.matmul %7, %8, %cst_8 {dimension_numbers = #tpu.dot_dimension_numbers<[1], [0], [0], [1], [0, 0, 1, 1], [], []>} : vector<128x64xf32>, vector<64x64xf32>, vector<128x64xf32> -> vector<128x64xf32>
    %c0_9 = arith.constant 0 : index
    %c0_10 = arith.constant 0 : index
    %10 = vector.load %arg5[%c0_9, %c0_10] : memref<1x64xf32, #tpu.memory_space<vmem>>, vector<1x64xf32>
    %11 = vector.broadcast %10 : vector<1x64xf32> to vector<128x64xf32>
    %12 = arith.addf %9, %11 : vector<128x64xf32>
    %cst_11 = arith.constant 0.000000e+00 : f32
    %13 = vector.broadcast %cst_11 : f32 to vector<128x64xf32>
    %14 = arith.maximumf %12, %13 : vector<128x64xf32>
    %c0_12 = arith.constant 0 : index
    %c0_13 = arith.constant 0 : index
    %15 = vector.load %arg6[%c0_12, %c0_13] : memref<64x32xf32, #tpu.memory_space<vmem>>, vector<64x32xf32>
    %cst_14 = arith.constant dense<0.000000e+00> : vector<128x32xf32>
    %16 = tpu.matmul %14, %15, %cst_14 {dimension_numbers = #tpu.dot_dimension_numbers<[1], [0], [0], [1], [0, 0, 1, 1], [], []>} : vector<128x64xf32>, vector<64x32xf32>, vector<128x32xf32> -> vector<128x32xf32>
    %c0_15 = arith.constant 0 : index
    %c0_16 = arith.constant 0 : index
    %17 = vector.load %arg7[%c0_15, %c0_16] : memref<1x32xf32, #tpu.memory_space<vmem>>, vector<1x32xf32>
    %18 = vector.broadcast %17 : vector<1x32xf32> to vector<128x32xf32>
    %19 = arith.addf %16, %18 : vector<128x32xf32>
    %cst_17 = arith.constant 0.000000e+00 : f32
    %20 = vector.broadcast %cst_17 : f32 to vector<128x32xf32>
    %21 = arith.maximumf %19, %20 : vector<128x32xf32>
    %c0_18 = arith.constant 0 : index
    %c0_19 = arith.constant 0 : index
    %22 = vector.load %arg8[%c0_18, %c0_19] : memref<128x32xf32, #tpu.memory_space<vmem>>, vector<128x32xf32>
    tpu.vector_store %arg8[%c0_18, %c0_19], %21 {strides = array<i32>} : memref<128x32xf32, #tpu.memory_space<vmem>>, vector<128x32xf32>,
    return
  }
  func.func @transform_0(%arg0: i32) -> (i32, i32) {
    %c0_i32 = arith.constant 0 : i32
    %c0_i32_0 = arith.constant 0 : i32
    return %arg0, %c0_i32 : i32, i32
  }
  func.func @transform_1(%arg0: i32) -> (i32, i32) {
    %c0_i32 = arith.constant 0 : i32
    %c0_i32_0 = arith.constant 0 : i32
    %c0_i32_1 = arith.constant 0 : i32
    return %c0_i32, %c0_i32_0 : i32, i32
  }
  func.func @transform_2(%arg0: i32) -> (i32, i32) {
    %c0_i32 = arith.constant 0 : i32
    %c0_i32_0 = arith.constant 0 : i32
    %c0_i32_1 = arith.constant 0 : i32
    return %c0_i32, %c0_i32_0 : i32, i32
  }
  func.func @transform_3(%arg0: i32) -> (i32, i32) {
    %c0_i32 = arith.constant 0 : i32
    %c0_i32_0 = arith.constant 0 : i32
    %c0_i32_1 = arith.constant 0 : i32
    return %c0_i32, %c0_i32_0 : i32, i32
  }
  func.func @transform_4(%arg0: i32) -> (i32, i32) {
    %c0_i32 = arith.constant 0 : i32
    %c0_i32_0 = arith.constant 0 : i32
    %c0_i32_1 = arith.constant 0 : i32
    return %c0_i32, %c0_i32_0 : i32, i32
  }
  func.func @transform_5(%arg0: i32) -> (i32, i32) {
    %c0_i32 = arith.constant 0 : i32
    %c0_i32_0 = arith.constant 0 : i32
    %c0_i32_1 = arith.constant 0 : i32
    return %c0_i32, %c0_i32_0 : i32, i32
  }
  func.func @transform_6(%arg0: i32) -> (i32, i32) {
    %c0_i32 = arith.constant 0 : i32
    %c0_i32_0 = arith.constant 0 : i32
    %c0_i32_1 = arith.constant 0 : i32
    return %c0_i32, %c0_i32_0 : i32, i32
  }
  func.func @transform_7(%arg0: i32) -> (i32, i32) {
    %c0_i32 = arith.constant 0 : i32
    %c0_i32_0 = arith.constant 0 : i32
    return %arg0, %c0_i32 : i32, i32
  }
}

</mosaic_0001>

<llo_original>
// kernel: tpu_custom_call.1
$region0: #{tpu_custom_call.1}
  #allocation0 [shape = 'u32[]', space=smem, size = 0x4, offset = 0x4, fixed_abs, tag = 'smem constant byte address 0x4 - core index']
  #allocation1 [shape = 'u32[144,128]{1,0:T(1,128)}', space=vmem, size = 0x12000, scoped, tag = 'internal scratch']
  %s0 = inlined_call_operand.vmem [shape: f32[200,32], index: 0, kind: input, shape index: {}]
  %s1 = inlined_call_operand.vmem [shape: f32[32,64], index: 1, kind: input, shape index: {}]
  %s2 = inlined_call_operand.vmem [shape: f32[1,64], index: 2, kind: input, shape index: {}]
  %s3 = inlined_call_operand.vmem [shape: f32[64,64], index: 3, kind: input, shape index: {}]
  %s4 = inlined_call_operand.vmem [shape: f32[1,64], index: 4, kind: input, shape index: {}]
  %s5 = inlined_call_operand.vmem [shape: f32[64,32], index: 5, kind: input, shape index: {}]
  %s6 = inlined_call_operand.vmem [shape: f32[1,32], index: 6, kind: input, shape index: {}]
  %s7 = inlined_call_operand.vmem [shape: f32[200,32], index: 7, kind: output, shape index: {}]
  %s8 = sld [smem:[#allocation0]]
  $region109: #{tpu_custom_call.1} parent=0
    _
  %s10 = ssub.s32 1, %s8
  %s11 = scalar_select 0, %s10, %s8
  $region1: #{tpu_custom_call.1} parent=0
    #allocation2 [shape = 'u8[131072]{0}', space=vmem, size = 0x20000, scoped, tag = 'output window, operand 0']
    loop: start=0, step=1, limit=4
    $region2: #{tpu_custom_call.1} parent=1 // loop_pre_header
      _
    $region3: #{tpu_custom_call.1} parent=1 // loop_header
      %s13 = sphi 0, %s17
      %p14 = scmp.ge.s32.totalorder %s13, 4
      %s23 = sphi 0, %s25
      %s26 = sphi 0, %s23
      %s27 = sphi 0, %s26
      %s43 = sphi 0, %s27
      %s47 = sphi 0, %s47
      %s49 = sphi 0, %s47
      %s50 = sphi 0, %s49
      %s64 = sphi 0, %s50
      %s68 = sphi 0, %s68
      %s70 = sphi 0, %s68
      %s71 = sphi 0, %s70
      %s85 = sphi 0, %s71
      %s89 = sphi 0, %s89
      %s91 = sphi 0, %s89
      %s92 = sphi 0, %s91
      %s106 = sphi 0, %s92
      %s110 = sphi 0, %s110
      %s112 = sphi 0, %s110
      %s113 = sphi 0, %s112
      %s127 = sphi 0, %s113
      %s131 = sphi 0, %s131
      %s133 = sphi 0, %s131
      %s134 = sphi 0, %s133
      %s148 = sphi 0, %s134
      %s152 = sphi 0, %s152
      %s154 = sphi 0, %s152
      %s155 = sphi 0, %s154
      %s169 = sphi 0, %s155
      %s175 = sphi 0, %s177
      %s178 = sphi 0, %s175
      %s179 = sphi 0, %s178
      %s195 = sphi 0, %s179
    $region4: #{tpu_custom_call.1} parent=1 // loop_header_branch
      %16 = sbr.rel (%p14) target = $region8
    $region5: #{tpu_custom_call.1} parent=1 // loop_body
      %s18 = ssub.s32 %s13, 1
      %s19 = ssub.s32 %s13, 2
      %s20 = sadd.s32 %s13, 1
      %s21 = ssub.s32 %s13, %s20
      %p22 = scmp.eq.s32.totalorder %s21, 0
      %s24 = sadd.s32 %s23, 1
      %s25 = scalar_select %p22, %s23, %s24
      %p28 = pneg %p22
      %p29 = scmp.eq.s32.totalorder %s13, 1
      %p30 = por %p28, %p29
      %p31 = scmp.ne.s32.totalorder %s23, %s26
      %p32 = scmp.eq.s32.totalorder %s13, 0
      %p33 = por %p31, %p32
      %p34 = scmp.ne.s32.totalorder %s23, %s26
      %p35 = scmp.eq.s32.totalorder %s18, 1
      %p36 = por %p34, %p35
      %p37 = scmp.ne.s32.totalorder %s26, %s27
      %p38 = scmp.eq.s32.totalorder %s18, 0
      %p39 = por %p37, %p38
      %p40 = scmp.ne.s32.totalorder %s26, %s27
      %p41 = scmp.eq.s32.totalorder %s19, 1
      %p42 = por %p40, %p41
      %p44 = scmp.ne.s32.totalorder %s27, %s43
      %p45 = scmp.eq.s32.totalorder %s19, 0
      %p46 = por %p44, %p45
      %s48 = sadd.s32 %s47, 1
      %p51 = scmp.eq.s32.totalorder %s13, 1
      %p52 = scmp.ne.s32.totalorder %s47, %s49
      %p53 = scmp.eq.s32.totalorder %s13, 0
      %p54 = por %p52, %p53
      %p55 = scmp.ne.s32.totalorder %s47, %s49
      %p56 = scmp.eq.s32.totalorder %s18, 1
      %p57 = por %p55, %p56
      %p58 = scmp.ne.s32.totalorder %s49, %s50
      %p59 = scmp.eq.s32.totalorder %s18, 0
      %p60 = por %p58, %p59
      %p61 = scmp.ne.s32.totalorder %s49, %s50
      %p62 = scmp.eq.s32.totalorder %s19, 1
      %p63 = por %p61, %p62
      %p65 = scmp.ne.s32.totalorder %s50, %s64
      %p66 = scmp.eq.s32.totalorder %s19, 0
      %p67 = por %p65, %p66
      %s69 = sadd.s32 %s68, 1
      %p72 = scmp.eq.s32.totalorder %s13, 1
      %p73 = scmp.ne.s32.totalorder %s68, %s70
      %p74 = scmp.eq.s32.totalorder %s13, 0
      %p75 = por %p73, %p74
      %p76 = scmp.ne.s32.totalorder %s68, %s70
      %p77 = scmp.eq.s32.totalorder %s18, 1
      %p78 = por %p76, %p77
      %p79 = scmp.ne.s32.totalorder %s70, %s71
      %p80 = scmp.eq.s32.totalorder %s18, 0
      %p81 = por %p79, %p80
      %p82 = scmp.ne.s32.totalorder %s70, %s71
      %p83 = scmp.eq.s32.totalorder %s19, 1
      %p84 = por %p82, %p83
      %p86 = scmp.ne.s32.totalorder %s71, %s85
      %p87 = scmp.eq.s32.totalorder %s19, 0
      %p88 = por %p86, %p87
      %s90 = sadd.s32 %s89, 1
      %p93 = scmp.eq.s32.totalorder %s13, 1
      %p94 = scmp.ne.s32.totalorder %s89, %s91
      %p95 = scmp.eq.s32.totalorder %s13, 0
      %p96 = por %p94, %p95
      %p97 = scmp.ne.s32.totalorder %s89, %s91
      %p98 = scmp.eq.s32.totalorder %s18, 1
      %p99 = por %p97, %p98
      %p100 = scmp.ne.s32.totalorder %s91, %s92
      %p101 = scmp.eq.s32.totalorder %s18, 0
      %p102 = por %p100, %p101
      %p103 = scmp.ne.s32.totalorder %s91, %s92
      %p104 = scmp.eq.s32.totalorder %s19, 1
      %p105 = por %p103, %p104
      %p107 = scmp.ne.s32.totalorder %s92, %s106
      %p108 = scmp.eq.s32.totalorder %s19, 0
      %p109 = por %p107, %p108
      %s111 = sadd.s32 %s110, 1
      %p114 = scmp.eq.s32.totalorder %s13, 1
      %p115 = scmp.ne.s32.totalorder %s110, %s112
      %p116 = scmp.eq.s32.totalorder %s13, 0
      %p117 = por %p115, %p116
      %p118 = scmp.ne.s32.totalorder %s110, %s112
      %p119 = scmp.eq.s32.totalorder %s18, 1
      %p120 = por %p118, %p119
      %p121 = scmp.ne.s32.totalorder %s112, %s113
      %p122 = scmp.eq.s32.totalorder %s18, 0
      %p123 = por %p121, %p122
      %p124 = scmp.ne.s32.totalorder %s112, %s113
      %p125 = scmp.eq.s32.totalorder %s19, 1
      %p126 = por %p124, %p125
      %p128 = scmp.ne.s32.totalorder %s113, %s127
      %p129 = scmp.eq.s32.totalorder %s19, 0
      %p130 = por %p128, %p129
      %s132 = sadd.s32 %s131, 1
      %p135 = scmp.eq.s32.totalorder %s13, 1
      %p136 = scmp.ne.s32.totalorder %s131, %s133
      %p137 = scmp.eq.s32.totalorder %s13, 0
      %p138 = por %p136, %p137
      %p139 = scmp.ne.s32.totalorder %s131, %s133
      %p140 = scmp.eq.s32.totalorder %s18, 1
      %p141 = por %p139, %p140
      %p142 = scmp.ne.s32.totalorder %s133, %s134
      %p143 = scmp.eq.s32.totalorder %s18, 0
      %p144 = por %p142, %p143
      %p145 = scmp.ne.s32.totalorder %s133, %s134
      %p146 = scmp.eq.s32.totalorder %s19, 1
      %p147 = por %p145, %p146
      %p149 = scmp.ne.s32.totalorder %s134, %s148
      %p150 = scmp.eq.s32.totalorder %s19, 0
      %p151 = por %p149, %p150
      %s153 = sadd.s32 %s152, 1
      %p156 = scmp.eq.s32.totalorder %s13, 1
      %p157 = scmp.ne.s32.totalorder %s152, %s154
      %p158 = scmp.eq.s32.totalorder %s13, 0
      %p159 = por %p157, %p158
      %p160 = scmp.ne.s32.totalorder %s152, %s154
      %p161 = scmp.eq.s32.totalorder %s18, 1
      %p162 = por %p160, %p161
      %p163 = scmp.ne.s32.totalorder %s154, %s155
      %p164 = scmp.eq.s32.totalorder %s18, 0
      %p165 = por %p163, %p164
      %p166 = scmp.ne.s32.totalorder %s154, %s155
      %p167 = scmp.eq.s32.totalorder %s19, 1
      %p168 = por %p166, %p167
      %p170 = scmp.ne.s32.totalorder %s155, %s169
      %p171 = scmp.eq.s32.totalorder %s19, 0
      %p172 = por %p170, %p171
      %s173 = ssub.s32 %s13, %s20
      %p174 = scmp.eq.s32.totalorder %s173, 0
      %s176 = sadd.s32 %s175, 1
      %s177 = scalar_select %p174, %s175, %s176
      %p180 = pneg %p174
      %p181 = scmp.eq.s32.totalorder %s13, 1
      %p182 = por %p180, %p181
      %p183 = scmp.ne.s32.totalorder %s175, %s178
      %p184 = scmp.eq.s32.totalorder %s13, 0
      %p185 = por %p183, %p184
      %p186 = scmp.ne.s32.totalorder %s175, %s178
      %p187 = scmp.eq.s32.totalorder %s18, 1
      %p188 = por %p186, %p187
      %p189 = scmp.ne.s32.totalorder %s178, %s179
      %p190 = scmp.eq.s32.totalorder %s18, 0
      %p191 = por %p189, %p190
      %p192 = scmp.ne.s32.totalorder %s178, %s179
      %p193 = scmp.eq.s32.totalorder %s19, 1
      %p194 = por %p192, %p193
      %p196 = scmp.ne.s32.totalorder %s179, %s195
      %p197 = scmp.eq.s32.totalorder %s19, 0
      %p198 = por %p196, %p197
      %p199 = scmp.le.s32.totalorder 1, %s13
      %p200 = scmp.lt.s32.totalorder %s13, 3
      %p201 = pnand %p199, %p200
      %p202 = pneg %p201
      // Predicated region
      $region9: #{tpu_custom_call.1} parent=5 // pred_check
        _
      $region10: #{tpu_custom_call.1} parent=5 // pred_check_branch
        %204 = sbr.rel (%p201) target = $region12
      $region11: #{tpu_custom_call.1} parent=5 // pred_region
        %s205 = ssub.s32 %s13, 1
        // Predicated region
        $region13: #{tpu_custom_call.1} parent=11 // pred_check
          %p206 = pneg %p60
        $region14: #{tpu_custom_call.1} parent=11 // pred_check_branch
          %208 = sbr.rel (%p206) target = $region16
        $region15: #{tpu_custom_call.1} parent=11 // pred_region
          _
        $region16: #{tpu_custom_call.1} parent=11 // pred_fallthru
          _
        // Predicated region
        $region17: #{tpu_custom_call.1} parent=11 // pred_check
          %p209 = pneg %p81
        $region18: #{tpu_custom_call.1} parent=11 // pred_check_branch
          %211 = sbr.rel (%p209) target = $region20
        $region19: #{tpu_custom_call.1} parent=11 // pred_region
          _
        $region20: #{tpu_custom_call.1} parent=11 // pred_fallthru
          _
        // Predicated region
        $region21: #{tpu_custom_call.1} parent=11 // pred_check
          %p212 = pneg %p102
        $region22: #{tpu_custom_call.1} parent=11 // pred_check_branch
          %214 = sbr.rel (%p212) target = $region24
        $region23: #{tpu_custom_call.1} parent=11 // pred_region
          _
        $region24: #{tpu_custom_call.1} parent=11 // pred_fallthru
          _
        // Predicated region
        $region25: #{tpu_custom_call.1} parent=11 // pred_check
          %p215 = pneg %p123
        $region26: #{tpu_custom_call.1} parent=11 // pred_check_branch
          %217 = sbr.rel (%p215) target = $region28
        $region27: #{tpu_custom_call.1} parent=11 // pred_region
          _
        $region28: #{tpu_custom_call.1} parent=11 // pred_fallthru
          _
        // Predicated region
        $region29: #{tpu_custom_call.1} parent=11 // pred_check
          %p218 = pneg %p144
        $region30: #{tpu_custom_call.1} parent=11 // pred_check_branch
          %220 = sbr.rel (%p218) target = $region32
        $region31: #{tpu_custom_call.1} parent=11 // pred_region
          _
        $region32: #{tpu_custom_call.1} parent=11 // pred_fallthru
          _
        // Predicated region
        $region33: #{tpu_custom_call.1} parent=11 // pred_check
          %p221 = pneg %p165
        $region34: #{tpu_custom_call.1} parent=11 // pred_check_branch
          %223 = sbr.rel (%p221) target = $region36
        $region35: #{tpu_custom_call.1} parent=11 // pred_region
          _
        $region36: #{tpu_custom_call.1} parent=11 // pred_fallthru
          _
      $region12: #{tpu_custom_call.1} parent=5 // pred_fallthru
        _
      %p224 = scmp.lt.s32.totalorder %s13, 2
      // Predicated region
      $region37: #{tpu_custom_call.1} parent=5 // pred_check
        %p225 = pneg %p224
      $region38: #{tpu_custom_call.1} parent=5 // pred_check_branch
        %227 = sbr.rel (%p225) target = $region40
      $region39: #{tpu_custom_call.1} parent=5 // pred_region
        // Predicated region
        $region41: #{tpu_custom_call.1} parent=39 // pred_check
          %p228 = pneg %p33
        $region42: #{tpu_custom_call.1} parent=39 // pred_check_branch
          %230 = sbr.rel (%p228) target = $region44
        $region43: #{tpu_custom_call.1} parent=39 // pred_region
          %s231 = smul.u32 16, %s13
          %s232 = ssub.s32 25, %s231
          %p233 = scmp.lt.s32.totalorder %s232, 16
          %s234 = scalar_select %p233, %s232, 16
          %s235 = smul.u32 128, %s234
          %p236 = scmp.lt.s32.totalorder %s231, 24
          %s237 = scalar_select %p236, %s231, 24
          %s238 = smul.addr %s237, 8
          %s239 = scalar_lea.vmem %s0, %s238
          %s240 = smul.u32 16, %s13
          %s241 = ssub.s32 25, %s240
          %p242 = scmp.lt.s32.totalorder %s241, 16
          %s243 = scalar_select %p242, %s241, 16
          %s244 = smul.u32 128, %s243
        $region44: #{tpu_custom_call.1} parent=39 // pred_fallthru
          _
      $region40: #{tpu_custom_call.1} parent=5 // pred_fallthru
        _
      %p245 = scmp.le.s32.totalorder 1, %s13
      %p246 = scmp.lt.s32.totalorder %s13, 3
      %p247 = pnand %p245, %p246
      %p248 = pneg %p247
      // Predicated region
      $region45: #{tpu_custom_call.1} parent=5 // pred_check
        _
      $region46: #{tpu_custom_call.1} parent=5 // pred_check_branch
        %250 = sbr.rel (%p247) target = $region48
      $region47: #{tpu_custom_call.1} parent=5 // pred_region
        %s251 = ssub.s32 %s13, 1
        %s252 = smul.u32 16, %s18
        %s253 = ssub.s32 25, %s252
        %p254 = scmp.lt.s32.totalorder %s253, 16
        %s255 = scalar_select %p254, %s253, 16
        %s256 = smul.u32 128, %s255
        %p257 = scmp.lt.s32.totalorder %s252, 24
        %s258 = scalar_select %p257, %s252, 24
        %s259 = smul.addr %s258, 8
        %s260 = scalar_lea.vmem %s0, %s259
        %p261 = pneg %p39
        %p262 = pneg %p36
        %p263 = pneg %p60
        %p264 = pneg %p57
        %p265 = pneg %p81
        %p266 = pneg %p78
        %p267 = pneg %p102
        %p268 = pneg %p99
        %p269 = pneg %p123
        %p270 = pneg %p120
        %p271 = pneg %p144
        %p272 = pneg %p141
        %p273 = pneg %p165
        %p274 = pneg %p162
        %p275 = pneg %p191
        %p276 = pneg %p188
        %s277 = sand.u32 %s178, 1
        %s278 = sand.u32 %s178, 1
        %s279 = smul.addr %s278, 128
        %s280 = scalar_lea.vmem [#allocation2], %s279
        %s281 = smul.u32 16, %s18
        %s282 = ssub.s32 25, %s281
        %p283 = scmp.lt.s32.totalorder %s282, 16
        %s284 = scalar_select %p283, %s282, 16
        %s285 = smul.u32 128, %s284
        %p286 = scmp.lt.s32.totalorder %s281, 24
        %s287 = scalar_select %p286, %s281, 24
        %s288 = smul.addr %s287, 8
        %s289 = scalar_lea.vmem %s0, %s288
        %s290 = smul.u32 16, %s18
        %s291 = ssub.s32 25, %s290
        %p292 = scmp.lt.s32.totalorder %s291, 16
        %s293 = scalar_select %p292, %s291, 16
        %s294 = smul.u32 128, %s293
        %s295 = smul.u32 16, %s18
        %s296 = ssub.s32 25, %s295
        %p297 = scmp.lt.s32.totalorder %s296, 16
        %s298 = scalar_select %p297, %s296, 16
        %s299 = smul.u32 128, %s298
        %v300 = vld [vmem:[%s289] sm:$0xff]
        %v301 = vld [vmem:[%s289 + $0x8] sm:$0xff]
        %v302 = vld [vmem:[%s289 + $0x10] sm:$0xff]
        %v303 = vld [vmem:[%s289 + $0x18] sm:$0xff]
        %v304 = vld [vmem:[%s289 + $0x20] sm:$0xff]
        %v305 = vld [vmem:[%s289 + $0x28] sm:$0xff]
        %v306 = vld [vmem:[%s289 + $0x30] sm:$0xff]
        %v307 = vld [vmem:[%s289 + $0x38] sm:$0xff]
        %v308 = vld [vmem:[%s289 + $0x40] sm:$0xff]
        %v309 = vld [vmem:[%s289 + $0x48] sm:$0xff]
        %v310 = vld [vmem:[%s289 + $0x50] sm:$0xff]
        %v311 = vld [vmem:[%s289 + $0x58] sm:$0xff]
        %v312 = vld [vmem:[%s289 + $0x60] sm:$0xff]
        %v313 = vld [vmem:[%s289 + $0x68] sm:$0xff]
        %v314 = vld [vmem:[%s289 + $0x70] sm:$0xff]
        %v315 = vld [vmem:[%s289 + $0x78] sm:$0xff]
        %v316 = vld [vmem:[%s1] sm:$0xff]
        %v317 = vld [vmem:[%s1 + $0x8] sm:$0xff]
        %v318 = vld [vmem:[%s1 + $0x10] sm:$0xff]
        %v319 = vld [vmem:[%s1 + $0x18] sm:$0xff]
        %v320 = vld [vmem:[%s2] sm:$0x1]
        %v322 = vlaneseq
        %v323 = vshrl.u32 %v322, 7
        %v324 = vsub.s32 0, %v323
        %v325 = vrot.slane %v320, %v324
        %vm327 = vcmask 261120
        %v329 = vsel %vm327, %v300, 0
        %v332 = vsel %vm327, %v301, 0
        %v335 = vsel %vm327, %v302, 0
        %v338 = vsel %vm327, %v303, 0
        %v341 = vsel %vm327, %v304, 0
        %v344 = vsel %vm327, %v305, 0
        %v347 = vsel %vm327, %v306, 0
        %v350 = vsel %vm327, %v307, 0
        %v353 = vsel %vm327, %v308, 0
        %v356 = vsel %vm327, %v309, 0
        %v359 = vsel %vm327, %v310, 0
        %v362 = vsel %vm327, %v311, 0
        %v365 = vsel %vm327, %v312, 0
        %v368 = vsel %vm327, %v313, 0
        %v371 = vsel %vm327, %v314, 0
        %v374 = vsel %vm327, %v315, 0
        %376 = vmatprep.subr.mxu0 0.0
        %377 = vmatpush1.msra.mxu0 %v316
        %378 = vmatprep.subr.mxu0 0.0
        %379 = vmatpush1.msra.mxu0 %v317
        %380 = vmatprep.subr.mxu0 0.0
        %381 = vmatpush1.msra.mxu0 %v318
        %382 = vmatprep.subr.mxu0 0.0
        %383 = vmatpush1.msra.mxu0 %v319
        %384 = vmatprep.subr.mxu0 0.0
        %385 = vmatpush1.msra.mxu0 0.0
        %386 = vmatprep.subr.mxu0 0.0
        %387 = vmatpush1.msra.mxu0 0.0
        %388 = vmatprep.subr.mxu0 0.0
        %389 = vmatpush1.msra.mxu0 0.0
        %390 = vmatprep.subr.mxu0 0.0
        %391 = vmatpush1.msra.mxu0 0.0
        %392 = vmatprep.subr.mxu0 0.0
        %393 = vmatpush1.msra.mxu0 0.0
        %394 = vmatprep.subr.mxu0 0.0
        %395 = vmatpush1.msra.mxu0 0.0
        %396 = vmatprep.subr.mxu0 0.0
        %397 = vmatpush1.msra.mxu0 0.0
        %398 = vmatprep.subr.mxu0 0.0
        %399 = vmatpush1.msra.mxu0 0.0
        %400 = vmatprep.subr.mxu0 0.0
        %401 = vmatpush1.msra.mxu0 0.0
        %402 = vmatprep.subr.mxu0 0.0
        %403 = vmatpush1.msra.mxu0 0.0
        %404 = vmatprep.subr.mxu0 0.0
        %405 = vmatpush1.msra.mxu0 0.0
        %406 = vmatprep.subr.mxu0 0.0
        %407 = vmatpush1.msra.mxu0 0.0
        %408 = vmatprep.subr.mxu0 0.0
        %409 = vmatpush1.msra.mxu0 0.0
        %410 = vmatprep.subr.mxu0 0.0
        %411 = vmatpush1.msra.mxu0 0.0
        %412 = vmatprep.subr.mxu0 0.0
        %413 = vmatpush1.msra.mxu0 0.0
        %414 = vmatprep.subr.mxu0 0.0
        %415 = vmatpush1.msra.mxu0 0.0
        %416 = vmatprep.subr.mxu0 0.0
        %417 = vmatpush1.msra.mxu0 0.0
        %418 = vmatprep.subr.mxu0 0.0
        %419 = vmatpush1.msra.mxu0 0.0
        %420 = vmatprep.subr.mxu0 0.0
        %421 = vmatpush1.msra.mxu0 0.0
        %422 = vmatprep.subr.mxu0 0.0
        %423 = vmatpush1.msra.mxu0 0.0
        %424 = vmatprep.subr.mxu0 0.0
        %425 = vmatpush1.msra.mxu0 0.0
        %426 = vmatprep.subr.mxu0 0.0
        %427 = vmatpush1.msra.mxu0 0.0
        %428 = vmatprep.subr.mxu0 0.0
        %429 = vmatpush1.msra.mxu0 0.0
        %430 = vmatprep.subr.mxu0 0.0
        %431 = vmatpush1.msra.mxu0 0.0
        %432 = vmatprep.subr.mxu0 0.0
        %433 = vmatpush1.msra.mxu0 0.0
        %434 = vmatprep.subr.mxu0 0.0
        %435 = vmatpush1.msra.mxu0 0.0
        %436 = vmatprep.subr.mxu0 0.0
        %437 = vmatpush1.msra.mxu0 0.0
        %438 = vmatprep.subr.mxu0 0.0
        %439 = vmatpush1.msra.mxu0 0.0
        %440 = vmatprep.mubr.f32.mxu0 0.0
        %441 = vmatmul.mubr.f32.gmra.mrb[0].mxu0 %v329
        %v442 = vpop.f32.mrb[0].mxu0
        %v443 = vadd.f32 %v325, %v442
        %v444 = vpop.f32.mrb[0].mxu0
        %445 = vmatprep.mubr.f32.mxu0 0.0
        %446 = vmatmul.mubr.f32.gmra.mrb[0].mxu0 %v332
        %v447 = vpop.f32.mrb[0].mxu0
        %v448 = vadd.f32 %v325, %v447
        %v449 = vpop.f32.mrb[0].mxu0
        %450 = vmatprep.mubr.f32.mxu0 0.0
        %451 = vmatmul.mubr.f32.gmra.mrb[0].mxu0 %v335
        %v452 = vpop.f32.mrb[0].mxu0
        %v453 = vadd.f32 %v325, %v452
        %v454 = vpop.f32.mrb[0].mxu0
        %455 = vmatprep.mubr.f32.mxu0 0.0
        %456 = vmatmul.mubr.f32.gmra.mrb[0].mxu0 %v338
        %v457 = vpop.f32.mrb[0].mxu0
        %v458 = vadd.f32 %v325, %v457
        %v459 = vpop.f32.mrb[0].mxu0
        %460 = vmatprep.mubr.f32.mxu0 0.0
        %461 = vmatmul.mubr.f32.gmra.mrb[0].mxu0 %v341
        %v462 = vpop.f32.mrb[0].mxu0
        %v463 = vadd.f32 %v325, %v462
        %v464 = vpop.f32.mrb[0].mxu0
        %465 = vmatprep.mubr.f32.mxu0 0.0
        %466 = vmatmul.mubr.f32.gmra.mrb[0].mxu0 %v344
        %v467 = vpop.f32.mrb[0].mxu0
        %v468 = vadd.f32 %v325, %v467
        %v469 = vpop.f32.mrb[0].mxu0
        %470 = vmatprep.mubr.f32.mxu0 0.0
        %471 = vmatmul.mubr.f32.gmra.mrb[0].mxu0 %v347
        %v472 = vpop.f32.mrb[0].mxu0
        %v473 = vadd.f32 %v325, %v472
        %v474 = vpop.f32.mrb[0].mxu0
        %475 = vmatprep.mubr.f32.mxu0 0.0
        %476 = vmatmul.mubr.f32.gmra.mrb[0].mxu0 %v350
        %v477 = vpop.f32.mrb[0].mxu0
        %v478 = vadd.f32 %v325, %v477
        %v479 = vpop.f32.mrb[0].mxu0
        %480 = vmatprep.mubr.f32.mxu0 0.0
        %481 = vmatmul.mubr.f32.gmra.mrb[0].mxu0 %v353
        %v482 = vpop.f32.mrb[0].mxu0
        %v483 = vadd.f32 %v325, %v482
        %v484 = vpop.f32.mrb[0].mxu0
        %485 = vmatprep.mubr.f32.mxu0 0.0
        %486 = vmatmul.mubr.f32.gmra.mrb[0].mxu0 %v356
        %v487 = vpop.f32.mrb[0].mxu0
        %v488 = vadd.f32 %v325, %v487
        %v489 = vpop.f32.mrb[0].mxu0
        %490 = vmatprep.mubr.f32.mxu0 0.0
        %491 = vmatmul.mubr.f32.gmra.mrb[0].mxu0 %v359
        %v492 = vpop.f32.mrb[0].mxu0
        %v493 = vadd.f32 %v325, %v492
        %v494 = vpop.f32.mrb[0].mxu0
        %495 = vmatprep.mubr.f32.mxu0 0.0
        %496 = vmatmul.mubr.f32.gmra.mrb[0].mxu0 %v362
        %v497 = vpop.f32.mrb[0].mxu0
        %v498 = vadd.f32 %v325, %v497
        %v499 = vpop.f32.mrb[0].mxu0
        %500 = vmatprep.mubr.f32.mxu0 0.0
        %501 = vmatmul.mubr.f32.gmra.mrb[0].mxu0 %v365
        %v502 = vpop.f32.mrb[0].mxu0
        %v503 = vadd.f32 %v325, %v502
        %v504 = vpop.f32.mrb[0].mxu0
        %505 = vmatprep.mubr.f32.mxu0 0.0
        %506 = vmatmul.mubr.f32.gmra.mrb[0].mxu0 %v368
        %v507 = vpop.f32.mrb[0].mxu0
        %v508 = vadd.f32 %v325, %v507
        %v509 = vpop.f32.mrb[0].mxu0
        %510 = vmatprep.mubr.f32.mxu0 0.0
        %511 = vmatmul.mubr.f32.gmra.mrb[0].mxu0 %v371
        %v512 = vpop.f32.mrb[0].mxu0
        %v513 = vadd.f32 %v325, %v512
        %v514 = vpop.f32.mrb[0].mxu0
        %515 = vmatprep.mubr.f32.mxu0 0.0
        %516 = vmatmul.mubr.f32.gmra.mrb[0].mxu0 %v374
        %v517 = vpop.f32.mrb[0].mxu0
        %v518 = vadd.f32 %v325, %v517
        %v519 = vpop.f32.mrb[0].mxu0
        %520 = vdwg.mxu0
        %v521 = vmax.f32 %v443, 0.0
        %v522 = vmax.f32 %v448, 0.0
        %v523 = vmax.f32 %v453, 0.0
        %v524 = vmax.f32 %v458, 0.0
        %v525 = vmax.f32 %v463, 0.0
        %v526 = vmax.f32 %v468, 0.0
        %v527 = vmax.f32 %v473, 0.0
        %v528 = vmax.f32 %v478, 0.0
        %v529 = vmax.f32 %v483, 0.0
        %v530 = vmax.f32 %v488, 0.0
        %v531 = vmax.f32 %v493, 0.0
        %v532 = vmax.f32 %v498, 0.0
        %v533 = vmax.f32 %v503, 0.0
        %v534 = vmax.f32 %v508, 0.0
        %v535 = vmax.f32 %v513, 0.0
        %v536 = vmax.f32 %v518, 0.0
        %v537 = vld [vmem:[%s3] sm:$0xff]
        %v538 = vld [vmem:[%s3 + $0x8] sm:$0xff]
        %v539 = vld [vmem:[%s3 + $0x10] sm:$0xff]
        %v540 = vld [vmem:[%s3 + $0x18] sm:$0xff]
        %v541 = vld [vmem:[%s3 + $0x20] sm:$0xff]
        %v542 = vld [vmem:[%s3 + $0x28] sm:$0xff]
        %v543 = vld [vmem:[%s3 + $0x30] sm:$0xff]
        %v544 = vld [vmem:[%s3 + $0x38] sm:$0xff]
        %v545 = vld [vmem:[%s4] sm:$0x1]
        %v547 = vlaneseq
        %v548 = vshrl.u32 %v547, 7
        %v549 = vsub.s32 0, %v548
        %v550 = vrot.slane %v545, %v549
        %vm552 = vcmask 523264
        %v554 = vsel %vm552, %v521, 0
        %v557 = vsel %vm552, %v522, 0
        %v560 = vsel %vm552, %v523, 0
        %v563 = vsel %vm552, %v524, 0
        %v566 = vsel %vm552, %v525, 0
        %v569 = vsel %vm552, %v526, 0
        %v572 = vsel %vm552, %v527, 0
        %v575 = vsel %vm552, %v528, 0
        %v578 = vsel %vm552, %v529, 0
        %v581 = vsel %vm552, %v530, 0
        %v584 = vsel %vm552, %v531, 0
        %v587 = vsel %vm552, %v532, 0
        %v590 = vsel %vm552, %v533, 0
        %v593 = vsel %vm552, %v534, 0
        %v596 = vsel %vm552, %v535, 0
        %v599 = vsel %vm552, %v536, 0
        %601 = vmatprep.subr.mxu0 0.0
        %602 = vmatpush1.msra.mxu0 %v537
        %603 = vmatprep.subr.mxu0 0.0
        %604 = vmatpush1.msra.mxu0 %v538
        %605 = vmatprep.subr.mxu0 0.0
        %606 = vmatpush1.msra.mxu0 %v539
        %607 = vmatprep.subr.mxu0 0.0
        %608 = vmatpush1.msra.mxu0 %v540
        %609 = vmatprep.subr.mxu0 0.0
        %610 = vmatpush1.msra.mxu0 %v541
        %611 = vmatprep.subr.mxu0 0.0
        %612 = vmatpush1.msra.mxu0 %v542
        %613 = vmatprep.subr.mxu0 0.0
        %614 = vmatpush1.msra.mxu0 %v543
        %615 = vmatprep.subr.mxu0 0.0
        %616 = vmatpush1.msra.mxu0 %v544
        %617 = vmatprep.subr.mxu0 0.0
        %618 = vmatpush1.msra.mxu0 0.0
        %619 = vmatprep.subr.mxu0 0.0
        %620 = vmatpush1.msra.mxu0 0.0
        %621 = vmatprep.subr.mxu0 0.0
        %622 = vmatpush1.msra.mxu0 0.0
        %623 = vmatprep.subr.mxu0 0.0
        %624 = vmatpush1.msra.mxu0 0.0
        %625 = vmatprep.subr.mxu0 0.0
        %626 = vmatpush1.msra.mxu0 0.0
        %627 = vmatprep.subr.mxu0 0.0
        %628 = vmatpush1.msra.mxu0 0.0
        %629 = vmatprep.subr.mxu0 0.0
        %630 = vmatpush1.msra.mxu0 0.0
        %631 = vmatprep.subr.mxu0 0.0
        %632 = vmatpush1.msra.mxu0 0.0
        %633 = vmatprep.subr.mxu0 0.0
        %634 = vmatpush1.msra.mxu0 0.0
        %635 = vmatprep.subr.mxu0 0.0
        %636 = vmatpush1.msra.mxu0 0.0
        %637 = vmatprep.subr.mxu0 0.0
        %638 = vmatpush1.msra.mxu0 0.0
        %639 = vmatprep.subr.mxu0 0.0
        %640 = vmatpush1.msra.mxu0 0.0
        %641 = vmatprep.subr.mxu0 0.0
        %642 = vmatpush1.msra.mxu0 0.0
        %643 = vmatprep.subr.mxu0 0.0
        %644 = vmatpush1.msra.mxu0 0.0
        %645 = vmatprep.subr.mxu0 0.0
        %646 = vmatpush1.msra.mxu0 0.0
        %647 = vmatprep.subr.mxu0 0.0
        %648 = vmatpush1.msra.mxu0 0.0
        %649 = vmatprep.subr.mxu0 0.0
        %650 = vmatpush1.msra.mxu0 0.0
        %651 = vmatprep.subr.mxu0 0.0
        %652 = vmatpush1.msra.mxu0 0.0
        %653 = vmatprep.subr.mxu0 0.0
        %654 = vmatpush1.msra.mxu0 0.0
        %655 = vmatprep.subr.mxu0 0.0
        %656 = vmatpush1.msra.mxu0 0.0
        %657 = vmatprep.subr.mxu0 0.0
        %658 = vmatpush1.msra.mxu0 0.0
        %659 = vmatprep.subr.mxu0 0.0
        %660 = vmatpush1.msra.mxu0 0.0
        %661 = vmatprep.subr.mxu0 0.0
        %662 = vmatpush1.msra.mxu0 0.0
        %663 = vmatprep.subr.mxu0 0.0
        %664 = vmatpush1.msra.mxu0 0.0
        %665 = vmatprep.mubr.f32.mxu0 0.0
        %666 = vmatmul.mubr.f32.gmra.mrb[0].mxu0 %v554
        %v667 = vpop.f32.mrb[0].mxu0
        %v668 = vadd.f32 %v550, %v667
        %v669 = vpop.f32.mrb[0].mxu0
        %670 = vmatprep.mubr.f32.mxu0 0.0
        %671 = vmatmul.mubr.f32.gmra.mrb[0].mxu0 %v557
        %v672 = vpop.f32.mrb[0].mxu0
        %v673 = vadd.f32 %v550, %v672
        %v674 = vpop.f32.mrb[0].mxu0
        %675 = vmatprep.mubr.f32.mxu0 0.0
        %676 = vmatmul.mubr.f32.gmra.mrb[0].mxu0 %v560
        %v677 = vpop.f32.mrb[0].mxu0
        %v678 = vadd.f32 %v550, %v677
        %v679 = vpop.f32.mrb[0].mxu0
        %680 = vmatprep.mubr.f32.mxu0 0.0
        %681 = vmatmul.mubr.f32.gmra.mrb[0].mxu0 %v563
        %v682 = vpop.f32.mrb[0].mxu0
        %v683 = vadd.f32 %v550, %v682
        %v684 = vpop.f32.mrb[0].mxu0
        %685 = vmatprep.mubr.f32.mxu0 0.0
        %686 = vmatmul.mubr.f32.gmra.mrb[0].mxu0 %v566
        %v687 = vpop.f32.mrb[0].mxu0
        %v688 = vadd.f32 %v550, %v687
        %v689 = vpop.f32.mrb[0].mxu0
        %690 = vmatprep.mubr.f32.mxu0 0.0
        %691 = vmatmul.mubr.f32.gmra.mrb[0].mxu0 %v569
        %v692 = vpop.f32.mrb[0].mxu0
        %v693 = vadd.f32 %v550, %v692
        %v694 = vpop.f32.mrb[0].mxu0
        %695 = vmatprep.mubr.f32.mxu0 0.0
        %696 = vmatmul.mubr.f32.gmra.mrb[0].mxu0 %v572
        %v697 = vpop.f32.mrb[0].mxu0
        %v698 = vadd.f32 %v550, %v697
        %v699 = vpop.f32.mrb[0].mxu0
        %700 = vmatprep.mubr.f32.mxu0 0.0
        %701 = vmatmul.mubr.f32.gmra.mrb[0].mxu0 %v575
        %v702 = vpop.f32.mrb[0].mxu0
        %v703 = vadd.f32 %v550, %v702
        %v704 = vpop.f32.mrb[0].mxu0
        %705 = vmatprep.mubr.f32.mxu0 0.0
        %706 = vmatmul.mubr.f32.gmra.mrb[0].mxu0 %v578
        %v707 = vpop.f32.mrb[0].mxu0
        %v708 = vadd.f32 %v550, %v707
        %v709 = vpop.f32.mrb[0].mxu0
        %710 = vmatprep.mubr.f32.mxu0 0.0
        %711 = vmatmul.mubr.f32.gmra.mrb[0].mxu0 %v581
        %v712 = vpop.f32.mrb[0].mxu0
        %v713 = vadd.f32 %v550, %v712
        %v714 = vpop.f32.mrb[0].mxu0
        %715 = vmatprep.mubr.f32.mxu0 0.0
        %716 = vmatmul.mubr.f32.gmra.mrb[0].mxu0 %v584
        %v717 = vpop.f32.mrb[0].mxu0
        %v718 = vadd.f32 %v550, %v717
        %v719 = vpop.f32.mrb[0].mxu0
        %720 = vmatprep.mubr.f32.mxu0 0.0
        %721 = vmatmul.mubr.f32.gmra.mrb[0].mxu0 %v587
        %v722 = vpop.f32.mrb[0].mxu0
        %v723 = vadd.f32 %v550, %v722
        %v724 = vpop.f32.mrb[0].mxu0
        %725 = vmatprep.mubr.f32.mxu0 0.0
        %726 = vmatmul.mubr.f32.gmra.mrb[0].mxu0 %v590
        %v727 = vpop.f32.mrb[0].mxu0
        %v728 = vadd.f32 %v550, %v727
        %v729 = vpop.f32.mrb[0].mxu0
        %730 = vmatprep.mubr.f32.mxu0 0.0
        %731 = vmatmul.mubr.f32.gmra.mrb[0].mxu0 %v593
        %v732 = vpop.f32.mrb[0].mxu0
        %v733 = vadd.f32 %v550, %v732
        %v734 = vpop.f32.mrb[0].mxu0
        %735 = vmatprep.mubr.f32.mxu0 0.0
        %736 = vmatmul.mubr.f32.gmra.mrb[0].mxu0 %v596
        %v737 = vpop.f32.mrb[0].mxu0
        %v738 = vadd.f32 %v550, %v737
        %v739 = vpop.f32.mrb[0].mxu0
        %740 = vmatprep.mubr.f32.mxu0 0.0
        %741 = vmatmul.mubr.f32.gmra.mrb[0].mxu0 %v599
        %v742 = vpop.f32.mrb[0].mxu0
        %v743 = vadd.f32 %v550, %v742
        %v744 = vpop.f32.mrb[0].mxu0
        %745 = vdwg.mxu0
        %v746 = vmax.f32 %v668, 0.0
        %v747 = vmax.f32 %v673, 0.0
        %v748 = vmax.f32 %v678, 0.0
        %v749 = vmax.f32 %v683, 0.0
        %v750 = vmax.f32 %v688, 0.0
        %v751 = vmax.f32 %v693, 0.0
        %v752 = vmax.f32 %v698, 0.0
        %v753 = vmax.f32 %v703, 0.0
        %v754 = vmax.f32 %v708, 0.0
        %v755 = vmax.f32 %v713, 0.0
        %v756 = vmax.f32 %v718, 0.0
        %v757 = vmax.f32 %v723, 0.0
        %v758 = vmax.f32 %v728, 0.0
        %v759 = vmax.f32 %v733, 0.0
        %v760 = vmax.f32 %v738, 0.0
        %v761 = vmax.f32 %v743, 0.0
        %v762 = vld [vmem:[%s5] sm:$0xff]
        %v763 = vld [vmem:[%s5 + $0x8] sm:$0xff]
        %v764 = vld [vmem:[%s5 + $0x10] sm:$0xff]
        %v765 = vld [vmem:[%s5 + $0x18] sm:$0xff]
        %v766 = vld [vmem:[%s5 + $0x20] sm:$0xff]
        %v767 = vld [vmem:[%s5 + $0x28] sm:$0xff]
        %v768 = vld [vmem:[%s5 + $0x30] sm:$0xff]
        %v769 = vld [vmem:[%s5 + $0x38] sm:$0xff]
        %v770 = vld [vmem:[%s6] sm:$0x1]
        %v772 = vlaneseq
        %v773 = vshrl.u32 %v772, 7
        %v774 = vsub.s32 0, %v773
        %v775 = vrot.slane %v770, %v774
        %v778 = vsel %vm552, %v746, 0
        %v781 = vsel %vm552, %v747, 0
        %v784 = vsel %vm552, %v748, 0
        %v787 = vsel %vm552, %v749, 0
        %v790 = vsel %vm552, %v750, 0
        %v793 = vsel %vm552, %v751, 0
        %v796 = vsel %vm552, %v752, 0
        %v799 = vsel %vm552, %v753, 0
        %v802 = vsel %vm552, %v754, 0
        %v805 = vsel %vm552, %v755, 0
        %v808 = vsel %vm552, %v756, 0
        %v811 = vsel %vm552, %v757, 0
        %v814 = vsel %vm552, %v758, 0
        %v817 = vsel %vm552, %v759, 0
        %v820 = vsel %vm552, %v760, 0
        %v823 = vsel %vm552, %v761, 0
        %825 = vmatprep.subr.mxu0 0.0
        %826 = vmatpush1.msra.mxu0 %v762
        %827 = vmatprep.subr.mxu0 0.0
        %828 = vmatpush1.msra.mxu0 %v763
        %829 = vmatprep.subr.mxu0 0.0
        %830 = vmatpush1.msra.mxu0 %v764
        %831 = vmatprep.subr.mxu0 0.0
        %832 = vmatpush1.msra.mxu0 %v765
        %833 = vmatprep.subr.mxu0 0.0
        %834 = vmatpush1.msra.mxu0 %v766
        %835 = vmatprep.subr.mxu0 0.0
        %836 = vmatpush1.msra.mxu0 %v767
        %837 = vmatprep.subr.mxu0 0.0
        %838 = vmatpush1.msra.mxu0 %v768
        %839 = vmatprep.subr.mxu0 0.0
        %840 = vmatpush1.msra.mxu0 %v769
        %841 = vmatprep.subr.mxu0 0.0
        %842 = vmatpush1.msra.mxu0 0.0
        %843 = vmatprep.subr.mxu0 0.0
        %844 = vmatpush1.msra.mxu0 0.0
        %845 = vmatprep.subr.mxu0 0.0
        %846 = vmatpush1.msra.mxu0 0.0
        %847 = vmatprep.subr.mxu0 0.0
        %848 = vmatpush1.msra.mxu0 0.0
        %849 = vmatprep.subr.mxu0 0.0
        %850 = vmatpush1.msra.mxu0 0.0
        %851 = vmatprep.subr.mxu0 0.0
        %852 = vmatpush1.msra.mxu0 0.0
        %853 = vmatprep.subr.mxu0 0.0
        %854 = vmatpush1.msra.mxu0 0.0
        %855 = vmatprep.subr.mxu0 0.0
        %856 = vmatpush1.msra.mxu0 0.0
        %857 = vmatprep.subr.mxu0 0.0
        %858 = vmatpush1.msra.mxu0 0.0
        %859 = vmatprep.subr.mxu0 0.0
        %860 = vmatpush1.msra.mxu0 0.0
        %861 = vmatprep.subr.mxu0 0.0
        %862 = vmatpush1.msra.mxu0 0.0
        %863 = vmatprep.subr.mxu0 0.0
        %864 = vmatpush1.msra.mxu0 0.0
        %865 = vmatprep.subr.mxu0 0.0
        %866 = vmatpush1.msra.mxu0 0.0
        %867 = vmatprep.subr.mxu0 0.0
        %868 = vmatpush1.msra.mxu0 0.0
        %869 = vmatprep.subr.mxu0 0.0
        %870 = vmatpush1.msra.mxu0 0.0
        %871 = vmatprep.subr.mxu0 0.0
        %872 = vmatpush1.msra.mxu0 0.0
        %873 = vmatprep.subr.mxu0 0.0
        %874 = vmatpush1.msra.mxu0 0.0
        %875 = vmatprep.subr.mxu0 0.0
        %876 = vmatpush1.msra.mxu0 0.0
        %877 = vmatprep.subr.mxu0 0.0
        %878 = vmatpush1.msra.mxu0 0.0
        %879 = vmatprep.subr.mxu0 0.0
        %880 = vmatpush1.msra.mxu0 0.0
        %881 = vmatprep.subr.mxu0 0.0
        %882 = vmatpush1.msra.mxu0 0.0
        %883 = vmatprep.subr.mxu0 0.0
        %884 = vmatpush1.msra.mxu0 0.0
        %885 = vmatprep.subr.mxu0 0.0
        %886 = vmatpush1.msra.mxu0 0.0
        %887 = vmatprep.subr.mxu0 0.0
        %888 = vmatpush1.msra.mxu0 0.0
        %889 = vmatprep.mubr.f32.mxu0 0.0
        %890 = vmatmul.mubr.f32.gmra.mrb[0].mxu0 %v778
        %v891 = vpop.f32.mrb[0].mxu0
        %v892 = vadd.f32 %v775, %v891
        %v893 = vpop.f32.mrb[0].mxu0
        %894 = vmatprep.mubr.f32.mxu0 0.0
        %895 = vmatmul.mubr.f32.gmra.mrb[0].mxu0 %v781
        %v896 = vpop.f32.mrb[0].mxu0
        %v897 = vadd.f32 %v775, %v896
        %v898 = vpop.f32.mrb[0].mxu0
        %899 = vmatprep.mubr.f32.mxu0 0.0
        %900 = vmatmul.mubr.f32.gmra.mrb[0].mxu0 %v784
        %v901 = vpop.f32.mrb[0].mxu0
        %v902 = vadd.f32 %v775, %v901
        %v903 = vpop.f32.mrb[0].mxu0
        %904 = vmatprep.mubr.f32.mxu0 0.0
        %905 = vmatmul.mubr.f32.gmra.mrb[0].mxu0 %v787
        %v906 = vpop.f32.mrb[0].mxu0
        %v907 = vadd.f32 %v775, %v906
        %v908 = vpop.f32.mrb[0].mxu0
        %909 = vmatprep.mubr.f32.mxu0 0.0
        %910 = vmatmul.mubr.f32.gmra.mrb[0].mxu0 %v790
        %v911 = vpop.f32.mrb[0].mxu0
        %v912 = vadd.f32 %v775, %v911
        %v913 = vpop.f32.mrb[0].mxu0
        %914 = vmatprep.mubr.f32.mxu0 0.0
        %915 = vmatmul.mubr.f32.gmra.mrb[0].mxu0 %v793
        %v916 = vpop.f32.mrb[0].mxu0
        %v917 = vadd.f32 %v775, %v916
        %v918 = vpop.f32.mrb[0].mxu0
        %919 = vmatprep.mubr.f32.mxu0 0.0
        %920 = vmatmul.mubr.f32.gmra.mrb[0].mxu0 %v796
        %v921 = vpop.f32.mrb[0].mxu0
        %v922 = vadd.f32 %v775, %v921
        %v923 = vpop.f32.mrb[0].mxu0
        %924 = vmatprep.mubr.f32.mxu0 0.0
        %925 = vmatmul.mubr.f32.gmra.mrb[0].mxu0 %v799
        %v926 = vpop.f32.mrb[0].mxu0
        %v927 = vadd.f32 %v775, %v926
        %v928 = vpop.f32.mrb[0].mxu0
        %929 = vmatprep.mubr.f32.mxu0 0.0
        %930 = vmatmul.mubr.f32.gmra.mrb[0].mxu0 %v802
        %v931 = vpop.f32.mrb[0].mxu0
        %v932 = vadd.f32 %v775, %v931
        %v933 = vpop.f32.mrb[0].mxu0
        %934 = vmatprep.mubr.f32.mxu0 0.0
        %935 = vmatmul.mubr.f32.gmra.mrb[0].mxu0 %v805
        %v936 = vpop.f32.mrb[0].mxu0
        %v937 = vadd.f32 %v775, %v936
        %v938 = vpop.f32.mrb[0].mxu0
        %939 = vmatprep.mubr.f32.mxu0 0.0
        %940 = vmatmul.mubr.f32.gmra.mrb[0].mxu0 %v808
        %v941 = vpop.f32.mrb[0].mxu0
        %v942 = vadd.f32 %v775, %v941
        %v943 = vpop.f32.mrb[0].mxu0
        %944 = vmatprep.mubr.f32.mxu0 0.0
        %945 = vmatmul.mubr.f32.gmra.mrb[0].mxu0 %v811
        %v946 = vpop.f32.mrb[0].mxu0
        %v947 = vadd.f32 %v775, %v946
        %v948 = vpop.f32.mrb[0].mxu0
        %949 = vmatprep.mubr.f32.mxu0 0.0
        %950 = vmatmul.mubr.f32.gmra.mrb[0].mxu0 %v814
        %v951 = vpop.f32.mrb[0].mxu0
        %v952 = vadd.f32 %v775, %v951
        %v953 = vpop.f32.mrb[0].mxu0
        %954 = vmatprep.mubr.f32.mxu0 0.0
        %955 = vmatmul.mubr.f32.gmra.mrb[0].mxu0 %v817
        %v956 = vpop.f32.mrb[0].mxu0
        %v957 = vadd.f32 %v775, %v956
        %v958 = vpop.f32.mrb[0].mxu0
        %959 = vmatprep.mubr.f32.mxu0 0.0
        %960 = vmatmul.mubr.f32.gmra.mrb[0].mxu0 %v820
        %v961 = vpop.f32.mrb[0].mxu0
        %v962 = vadd.f32 %v775, %v961
        %v963 = vpop.f32.mrb[0].mxu0
        %964 = vmatprep.mubr.f32.mxu0 0.0
        %965 = vmatmul.mubr.f32.gmra.mrb[0].mxu0 %v823
        %v966 = vpop.f32.mrb[0].mxu0
        %v967 = vadd.f32 %v775, %v966
        %v968 = vpop.f32.mrb[0].mxu0
        %969 = vdwg.mxu0
        %v970 = vmax.f32 %v892, 0.0
        %v971 = vmax.f32 %v897, 0.0
        %v972 = vmax.f32 %v902, 0.0
        %v973 = vmax.f32 %v907, 0.0
        %v974 = vmax.f32 %v912, 0.0
        %v975 = vmax.f32 %v917, 0.0
        %v976 = vmax.f32 %v922, 0.0
        %v977 = vmax.f32 %v927, 0.0
        %v978 = vmax.f32 %v932, 0.0
        %v979 = vmax.f32 %v937, 0.0
        %v980 = vmax.f32 %v942, 0.0
        %v981 = vmax.f32 %v947, 0.0
        %v982 = vmax.f32 %v952, 0.0
        %v983 = vmax.f32 %v957, 0.0
        %v984 = vmax.f32 %v962, 0.0
        %v985 = vmax.f32 %v967, 0.0
        %986 = vst.msk [vmem:[%s280] sm:$0xff] %vm327, %v970
        %987 = vst.msk [vmem:[%s280 + $0x8] sm:$0xff] %vm327, %v971
        %988 = vst.msk [vmem:[%s280 + $0x10] sm:$0xff] %vm327, %v972
        %989 = vst.msk [vmem:[%s280 + $0x18] sm:$0xff] %vm327, %v973
        %990 = vst.msk [vmem:[%s280 + $0x20] sm:$0xff] %vm327, %v974
        %991 = vst.msk [vmem:[%s280 + $0x28] sm:$0xff] %vm327, %v975
        %992 = vst.msk [vmem:[%s280 + $0x30] sm:$0xff] %vm327, %v976
        %993 = vst.msk [vmem:[%s280 + $0x38] sm:$0xff] %vm327, %v977
        %994 = vst.msk [vmem:[%s280 + $0x40] sm:$0xff] %vm327, %v978
        %995 = vst.msk [vmem:[%s280 + $0x48] sm:$0xff] %vm327, %v979
        %996 = vst.msk [vmem:[%s280 + $0x50] sm:$0xff] %vm327, %v980
        %997 = vst.msk [vmem:[%s280 + $0x58] sm:$0xff] %vm327, %v981
        %998 = vst.msk [vmem:[%s280 + $0x60] sm:$0xff] %vm327, %v982
        %999 = vst.msk [vmem:[%s280 + $0x68] sm:$0xff] %vm327, %v983
        %1000 = vst.msk [vmem:[%s280 + $0x70] sm:$0xff] %vm327, %v984
        %1001 = vst.msk [vmem:[%s280 + $0x78] sm:$0xff] %vm327, %v985
        %s1002 = sand.u32 %s178, 1
        %s1003 = sand.u32 %s178, 1
        %s1004 = smul.addr %s1003, 128
        %s1005 = scalar_lea.vmem [#allocation2], %s1004
        // Predicated region
        $region49: #{tpu_custom_call.1} parent=47 // pred_check
          %p1006 = pneg %p188
        $region50: #{tpu_custom_call.1} parent=47 // pred_check_branch
          %1008 = sbr.rel (%p1006) target = $region52
        $region51: #{tpu_custom_call.1} parent=47 // pred_region
          %s1009 = smul.u32 16, %s18
          %s1010 = ssub.s32 25, %s1009
          %p1011 = scmp.lt.s32.totalorder %s1010, 16
          %s1012 = scalar_select %p1011, %s1010, 16
          %s1013 = smul.u32 128, %s1012
          %p1014 = scmp.ne.s32.totalorder 0, %s1013
          %s1015 = smul.addr %s1009, 8
          %s1016 = scalar_lea.vmem %s7, %s1015
          // Predicated region
          $region53: #{tpu_custom_call.1} parent=51 // pred_check
            %p1017 = pneg %p1014
          $region54: #{tpu_custom_call.1} parent=51 // pred_check_branch
            %1019 = sbr.rel (%p1017) target = $region56
          $region55: #{tpu_custom_call.1} parent=51 // pred_region
            // Predicated region
            $region57: #{tpu_custom_call.1} parent=55 // pred_check
              _
            $region58: #{tpu_custom_call.1} parent=55 // pred_check_branch
              %1021 = sbr.rel (0) target = $region60
            $region59: #{tpu_custom_call.1} parent=55 // pred_region
              // Predicated region
              $region79: #{tpu_custom_call.1} parent=59 // pred_check
                _
              $region80: #{tpu_custom_call.1} parent=59 // pred_check_branch
                %1100 = sbr.rel (0) target = $region82
              $region81: #{tpu_custom_call.1} parent=59 // pred_region
                %s1101 = sshrl.u32 %s1012, 4
                // While loop
                $region83: #{tpu_custom_call.1} parent=81 // loop_pre_header
                  _
                $region84: #{tpu_custom_call.1} parent=81 // loop_header
                  %s1103 = sphi 0, %s1105
                  %p1104 = scmp.ge.s32.totalorder %s1103, %s1101
                  %s1108 = sphi 0, %s1145
                  %s1109 = sphi %s1005, %s1148
                  %s1110 = sphi %s1016, %s1149
                $region85: #{tpu_custom_call.1} parent=81 // loop_header_branch
                  %1107 = sbr.rel (%p1104) target = $region89
                $region86: #{tpu_custom_call.1} parent=81 // loop_body
                  %v1111 = vld [vmem:[%s1109] sm:$0xff]
                  %1112 = vst [vmem:[%s1110] sm:$0xff] %v1111
                  %v1113 = vld [vmem:[%s1109 + $0x8] sm:$0xff]
                  %1114 = vst [vmem:[%s1110 + $0x8] sm:$0xff] %v1113
                  %v1115 = vld [vmem:[%s1109 + $0x10] sm:$0xff]
                  %1116 = vst [vmem:[%s1110 + $0x10] sm:$0xff] %v1115
                  %v1117 = vld [vmem:[%s1109 + $0x18] sm:$0xff]
                  %1118 = vst [vmem:[%s1110 + $0x18] sm:$0xff] %v1117
                  %v1119 = vld [vmem:[%s1109 + $0x20] sm:$0xff]
                  %1120 = vst [vmem:[%s1110 + $0x20] sm:$0xff] %v1119
                  %v1121 = vld [vmem:[%s1109 + $0x28] sm:$0xff]
                  %1122 = vst [vmem:[%s1110 + $0x28] sm:$0xff] %v1121
                  %v1123 = vld [vmem:[%s1109 + $0x30] sm:$0xff]
                  %1124 = vst [vmem:[%s1110 + $0x30] sm:$0xff] %v1123
                  %v1125 = vld [vmem:[%s1109 + $0x38] sm:$0xff]
                  %1126 = vst [vmem:[%s1110 + $0x38] sm:$0xff] %v1125
                  %v1127 = vld [vmem:[%s1109 + $0x40] sm:$0xff]
                  %1128 = vst [vmem:[%s1110 + $0x40] sm:$0xff] %v1127
                  %v1129 = vld [vmem:[%s1109 + $0x48] sm:$0xff]
                  %1130 = vst [vmem:[%s1110 + $0x48] sm:$0xff] %v1129
                  %v1131 = vld [vmem:[%s1109 + $0x50] sm:$0xff]
                  %1132 = vst [vmem:[%s1110 + $0x50] sm:$0xff] %v1131
                  %v1133 = vld [vmem:[%s1109 + $0x58] sm:$0xff]
                  %1134 = vst [vmem:[%s1110 + $0x58] sm:$0xff] %v1133
                  %v1135 = vld [vmem:[%s1109 + $0x60] sm:$0xff]
                  %1136 = vst [vmem:[%s1110 + $0x60] sm:$0xff] %v1135
                  %v1137 = vld [vmem:[%s1109 + $0x68] sm:$0xff]
                  %1138 = vst [vmem:[%s1110 + $0x68] sm:$0xff] %v1137
                  %v1139 = vld [vmem:[%s1109 + $0x70] sm:$0xff]
                  %1140 = vst [vmem:[%s1110 + $0x70] sm:$0xff] %v1139
                  %v1141 = vld [vmem:[%s1109 + $0x78] sm:$0xff]
                  %1142 = vst [vmem:[%s1110 + $0x78] sm:$0xff] %v1141
                  %s1143 = sadd.s32 1, %s1108
                  %p1144 = scmp.ge.s32.totalorder %s1143, %s1101
                  %s1145 = scalar_select %p1144, 0, %s1143
                  %s1146 = smul.u32 %s1145, 128
                  %s1147 = smul.u32 %s1145, 128
                  %s1148 = scalar_lea.vmem %s1005, %s1146 [#allocation2]
                  %s1149 = scalar_lea.vmem %s1016, %s1147
                $region87: #{tpu_custom_call.1} parent=81 // loop_footer
                  %s1105 = sadd.s32 %s1103, 1
                $region88: #{tpu_custom_call.1} parent=81 // loop_footer_branch
                  %1102 = sbr.rel target = $region84
                $region89: #{tpu_custom_call.1} parent=81 // loop_exit
                  _
                %s1150 = sshrl.u32 %s1012, 4
                %s1151 = sand.u32 %s1012, 15
                %s1152 = smul.u32 %s1150, 16
                %s1153 = smul.u32 8, %s1152
                %s1154 = scalar_lea.vmem %s1005, %s1153 [#allocation2]
                %s1155 = smul.u32 8, %s1152
                %s1156 = scalar_lea.vmem %s1016, %s1155
                // While loop
                $region90: #{tpu_custom_call.1} parent=81 // loop_pre_header
                  _
                $region91: #{tpu_custom_call.1} parent=81 // loop_header
                  %s1158 = sphi 0, %s1160
                  %p1159 = scmp.ge.s32.totalorder %s1158, %s1151
                  %s1163 = sphi 0, %s1170
                  %s1164 = sphi %s1154, %s1173
                  %s1165 = sphi %s1156, %s1174
                $region92: #{tpu_custom_call.1} parent=81 // loop_header_branch
                  %1162 = sbr.rel (%p1159) target = $region96
                $region93: #{tpu_custom_call.1} parent=81 // loop_body
                  %v1166 = vld [vmem:[%s1164] sm:$0xff]
                  %1167 = vst [vmem:[%s1165] sm:$0xff] %v1166
                  %s1168 = sadd.s32 1, %s1163
                  %p1169 = scmp.ge.s32.totalorder %s1168, %s1151
                  %s1170 = scalar_select %p1169, 0, %s1168
                  %s1171 = smul.u32 %s1170, 8
                  %s1172 = smul.u32 %s1170, 8
                  %s1173 = scalar_lea.vmem %s1154, %s1171 [#allocation2]
                  %s1174 = scalar_lea.vmem %s1156, %s1172
                $region94: #{tpu_custom_call.1} parent=81 // loop_footer
                  %s1160 = sadd.s32 %s1158, 1
                $region95: #{tpu_custom_call.1} parent=81 // loop_footer_branch
                  %1157 = sbr.rel target = $region91
                $region96: #{tpu_custom_call.1} parent=81 // loop_exit
                  _
              $region82: #{tpu_custom_call.1} parent=59 // pred_fallthru
                _
              // Predicated region
              $region97: #{tpu_custom_call.1} parent=59 // pred_check
                _
              $region98: #{tpu_custom_call.1} parent=59 // pred_check_branch
                %1176 = sbr.rel target = $region100
              $region99: #{tpu_custom_call.1} parent=59 // pred_region
                _
              $region100: #{tpu_custom_call.1} parent=59 // pred_fallthru
                _
            $region60: #{tpu_custom_call.1} parent=55 // pred_fallthru
              _
            // Predicated region
            $region61: #{tpu_custom_call.1} parent=55 // pred_check
              _
            $region62: #{tpu_custom_call.1} parent=55 // pred_check_branch
              %1023 = sbr.rel target = $region64
            $region63: #{tpu_custom_call.1} parent=55 // pred_region
              %s1025 = sshrl.u32 %s1012, 4
              // While loop
              $region65: #{tpu_custom_call.1} parent=63 // loop_pre_header
                _
              $region66: #{tpu_custom_call.1} parent=63 // loop_header
                %s1027 = sphi 0, %s1029
                %p1028 = scmp.ge.s32.totalorder %s1027, %s1025
                %s1032 = sphi 0, %s1069
                %s1033 = sphi %s1005, %s1072
                %s1034 = sphi %s1016, %s1073
              $region67: #{tpu_custom_call.1} parent=63 // loop_header_branch
                %1031 = sbr.rel (%p1028) target = $region71
              $region68: #{tpu_custom_call.1} parent=63 // loop_body
                %v1035 = vld [vmem:[%s1033] sm:$0xff]
                %1036 = vst [vmem:[%s1034] sm:$0xff] %v1035
                %v1037 = vld [vmem:[%s1033 + $0x8] sm:$0xff]
                %1038 = vst [vmem:[%s1034 + $0x8] sm:$0xff] %v1037
                %v1039 = vld [vmem:[%s1033 + $0x10] sm:$0xff]
                %1040 = vst [vmem:[%s1034 + $0x10] sm:$0xff] %v1039
                %v1041 = vld [vmem:[%s1033 + $0x18] sm:$0xff]
                %1042 = vst [vmem:[%s1034 + $0x18] sm:$0xff] %v1041
                %v1043 = vld [vmem:[%s1033 + $0x20] sm:$0xff]
                %1044 = vst [vmem:[%s1034 + $0x20] sm:$0xff] %v1043
                %v1045 = vld [vmem:[%s1033 + $0x28] sm:$0xff]
                %1046 = vst [vmem:[%s1034 + $0x28] sm:$0xff] %v1045
                %v1047 = vld [vmem:[%s1033 + $0x30] sm:$0xff]
                %1048 = vst [vmem:[%s1034 + $0x30] sm:$0xff] %v1047
                %v1049 = vld [vmem:[%s1033 + $0x38] sm:$0xff]
                %1050 = vst [vmem:[%s1034 + $0x38] sm:$0xff] %v1049
                %v1051 = vld [vmem:[%s1033 + $0x40] sm:$0xff]
                %1052 = vst [vmem:[%s1034 + $0x40] sm:$0xff] %v1051
                %v1053 = vld [vmem:[%s1033 + $0x48] sm:$0xff]
                %1054 = vst [vmem:[%s1034 + $0x48] sm:$0xff] %v1053
                %v1055 = vld [vmem:[%s1033 + $0x50] sm:$0xff]
                %1056 = vst [vmem:[%s1034 + $0x50] sm:$0xff] %v1055
                %v1057 = vld [vmem:[%s1033 + $0x58] sm:$0xff]
                %1058 = vst [vmem:[%s1034 + $0x58] sm:$0xff] %v1057
                %v1059 = vld [vmem:[%s1033 + $0x60] sm:$0xff]
                %1060 = vst [vmem:[%s1034 + $0x60] sm:$0xff] %v1059
                %v1061 = vld [vmem:[%s1033 + $0x68] sm:$0xff]
                %1062 = vst [vmem:[%s1034 + $0x68] sm:$0xff] %v1061
                %v1063 = vld [vmem:[%s1033 + $0x70] sm:$0xff]
                %1064 = vst [vmem:[%s1034 + $0x70] sm:$0xff] %v1063
                %v1065 = vld [vmem:[%s1033 + $0x78] sm:$0xff]
                %1066 = vst [vmem:[%s1034 + $0x78] sm:$0xff] %v1065
                %s1067 = sadd.s32 1, %s1032
                %p1068 = scmp.ge.s32.totalorder %s1067, %s1025
                %s1069 = scalar_select %p1068, 0, %s1067
                %s1070 = smul.u32 %s1069, 128
                %s1071 = smul.u32 %s1069, 128
                %s1072 = scalar_lea.vmem %s1005, %s1070 [#allocation2]
                %s1073 = scalar_lea.vmem %s1016, %s1071
              $region69: #{tpu_custom_call.1} parent=63 // loop_footer
                %s1029 = sadd.s32 %s1027, 1
              $region70: #{tpu_custom_call.1} parent=63 // loop_footer_branch
                %1026 = sbr.rel target = $region66
              $region71: #{tpu_custom_call.1} parent=63 // loop_exit
                _
              %s1074 = sshrl.u32 %s1012, 4
              %s1075 = sand.u32 %s1012, 15
              %s1076 = smul.u32 %s1074, 16
              %s1077 = smul.u32 8, %s1076
              %s1078 = scalar_lea.vmem %s1005, %s1077 [#allocation2]
              %s1079 = smul.u32 8, %s1076
              %s1080 = scalar_lea.vmem %s1016, %s1079
              // While loop
              $region72: #{tpu_custom_call.1} parent=63 // loop_pre_header
                _
              $region73: #{tpu_custom_call.1} parent=63 // loop_header
                %s1082 = sphi 0, %s1084
                %p1083 = scmp.ge.s32.totalorder %s1082, %s1075
                %s1087 = sphi 0, %s1094
                %s1088 = sphi %s1078, %s1097
                %s1089 = sphi %s1080, %s1098
              $region74: #{tpu_custom_call.1} parent=63 // loop_header_branch
                %1086 = sbr.rel (%p1083) target = $region78
              $region75: #{tpu_custom_call.1} parent=63 // loop_body
                %v1090 = vld [vmem:[%s1088] sm:$0xff]
                %1091 = vst [vmem:[%s1089] sm:$0xff] %v1090
                %s1092 = sadd.s32 1, %s1087
                %p1093 = scmp.ge.s32.totalorder %s1092, %s1075
                %s1094 = scalar_select %p1093, 0, %s1092
                %s1095 = smul.u32 %s1094, 8
                %s1096 = smul.u32 %s1094, 8
                %s1097 = scalar_lea.vmem %s1078, %s1095 [#allocation2]
                %s1098 = scalar_lea.vmem %s1080, %s1096
              $region76: #{tpu_custom_call.1} parent=63 // loop_footer
                %s1084 = sadd.s32 %s1082, 1
              $region77: #{tpu_custom_call.1} parent=63 // loop_footer_branch
                %1081 = sbr.rel target = $region73
              $region78: #{tpu_custom_call.1} parent=63 // loop_exit
                _
            $region64: #{tpu_custom_call.1} parent=55 // pred_fallthru
              _
          $region56: #{tpu_custom_call.1} parent=51 // pred_fallthru
            _
          %1177 = vnop
        $region52: #{tpu_custom_call.1} parent=47 // pred_fallthru
          _
      $region48: #{tpu_custom_call.1} parent=5 // pred_fallthru
        _
      %p1178 = scmp.le.s32.totalorder 2, %s13
      // Predicated region
      $region101: #{tpu_custom_call.1} parent=5 // pred_check
        %p1179 = pneg %p1178
      $region102: #{tpu_custom_call.1} parent=5 // pred_check_branch
        %1181 = sbr.rel (%p1179) target = $region104
      $region103: #{tpu_custom_call.1} parent=5 // pred_region
        %s1182 = ssub.s32 %s13, 2
        // Predicated region
        $region105: #{tpu_custom_call.1} parent=103 // pred_check
          %p1183 = pneg %p194
        $region106: #{tpu_custom_call.1} parent=103 // pred_check_branch
          %1185 = sbr.rel (%p1183) target = $region108
        $region107: #{tpu_custom_call.1} parent=103 // pred_region
          %s1186 = sand.u32 %s179, 1
          %s1187 = sand.u32 %s179, 1
          %s1188 = smul.addr %s1187, 128
          %s1189 = scalar_lea.vmem [#allocation2], %s1188
        $region108: #{tpu_custom_call.1} parent=103 // pred_fallthru
          _
      $region104: #{tpu_custom_call.1} parent=5 // pred_fallthru
        _
    $region6: #{tpu_custom_call.1} parent=1 // loop_footer
      %s17 = sadd.s32 1, %s13
    $region7: #{tpu_custom_call.1} parent=1 // loop_footer_branch
      %12 = sbr.rel target = $region3
    $region8: #{tpu_custom_call.1} parent=1 // loop_exit
      _

</llo_original>
